<compile_context>
chip_gen: v7x
topology: tpu7x:2x2x1
jax: 0.10.0
libtpu: 0.0.40
codegen_flags: <defaults>
</compile_context>

<pallas_src>
import functools

import jax
import jax.numpy as jnp
from jax.experimental import pallas as pl
from jax.experimental.pallas import tpu as pltpu

LN_EPS = 1e-5  # torch.nn.LayerNorm default; fresh LayerNorm => gamma=1, beta=0
_LANE = 128
_SUBLANE = 8


def _round_up(x, m):
    return (x + m - 1) // m * m


def ffn_ln_kernel(x_ref, w1_ref, w2_ref, o_ref, *, inv_d_model):
    """One [tile_m, d_pad] row tile: FFN + residual + LayerNorm, fully fused.

    x_ref : [tile_m, d_pad] f32 (rows / lanes zero-padded)
    w1_ref: [d_pad, d_ff]   (bf16 or f32)
    w2_ref: [d_ff, d_pad]   (bf16 or f32)
    """
    x = x_ref[...]                 # f32, kept for the residual / LayerNorm
    w1 = w1_ref[...]
    w2 = w2_ref[...]

    # FFN hot path on the MXU: low-precision inputs, f32 accumulation.
    h = jnp.dot(x.astype(w1.dtype), w1, preferred_element_type=jnp.float32)
    h = jnp.maximum(h, 0.0)                                    # ReLU
    y = jnp.dot(h.astype(w2.dtype), w2, preferred_element_type=jnp.float32)
    y = y + x                                                  # residual (f32)

    # LayerNorm over the *real* d_model lanes (gamma=1, beta=0). Padded lanes
    # of y are exactly zero (zero-padded x lanes + zero W1 rows / W2 columns),
    # so plain lane sums equal sums over the real lanes; divide by the real
    # d_model. One pass: sum and sum-of-squares.
    s1 = jnp.sum(y, axis=-1, keepdims=True)
    s2 = jnp.sum(y * y, axis=-1, keepdims=True)
    mean = s1 * inv_d_model
    var = jnp.maximum(s2 * inv_d_model - mean * mean, 0.0)
    o_ref[...] = ((y - mean) * jax.lax.rsqrt(var + LN_EPS)).astype(o_ref.dtype)


def poswise_ffn(x, w1, w2, *, tile_m=256, weight_dtype=jnp.bfloat16):
    """x: [B, S, d_model]; w1: [d_model, d_ff]; w2: [d_ff, d_model]."""
    B, S, d_model = x.shape
    d_ff = w1.shape[1]
    assert w1.shape == (d_model, d_ff) and w2.shape == (d_ff, d_model)

    M = B * S
    # Lane-dense layout: pad d_model to a multiple of 128.
    d_pad = _round_up(d_model, _LANE)
    # Large row tiles amortize the ~0.35us/step grid overhead and fill the MXU
    # row dimension; clamp for small problems and pad M (no assert on M).
    tile_m = min(tile_m, _round_up(M, _SUBLANE))
    m_pad = _round_up(M, tile_m)

    x2d = jnp.pad(x.reshape(M, d_model).astype(jnp.float32),
                  ((0, m_pad - M), (0, d_pad - d_model)))
    w1p = jnp.pad(w1, ((0, d_pad - d_model), (0, 0))).astype(weight_dtype)
    w2p = jnp.pad(w2, ((0, 0), (0, d_pad - d_model))).astype(weight_dtype)

    wbytes = jnp.dtype(weight_dtype).itemsize
    # VMEM budget: double-buffered x/out tiles (f32) + double-buffered weights,
    # plus headroom for the h intermediate / compiler scratch.
    vmem_needed = 2 * 2 * tile_m * d_pad * 4 + 2 * 2 * d_pad * d_ff * wbytes
    vmem_limit = int(max(vmem_needed + (8 << 20), 32 << 20))
    # TODO(synk): at production sizes on v7x (64 MiB VMEM) add a d_ff grid axis
    # ("arbitrary", last) with a VMEM accumulator instead of raising this limit.

    cost = pl.CostEstimate(
        flops=int(2 * 2 * M * d_model * d_ff),
        transcendentals=int(M),  # one rsqrt per row
        bytes_accessed=int(x2d.size * 4 + w1p.size * wbytes
                           + w2p.size * wbytes + m_pad * d_pad * 4),
    )

    kernel = functools.partial(ffn_ln_kernel, inv_d_model=1.0 / d_model)
    out2d = pl.pallas_call(
        kernel,
        out_shape=jax.ShapeDtypeStruct((m_pad, d_pad), x.dtype),
        grid_spec=pltpu.PrefetchScalarGridSpec(
            num_scalar_prefetch=0,
            grid=(m_pad // tile_m,),
            in_specs=[
                pl.BlockSpec((tile_m, d_pad), lambda i: (i, 0)),
                pl.BlockSpec((d_pad, d_ff), lambda i: (0, 0)),   # resident W1
                pl.BlockSpec((d_ff, d_pad), lambda i: (0, 0)),   # resident W2
            ],
            out_specs=pl.BlockSpec((tile_m, d_pad), lambda i: (i, 0)),
        ),
        compiler_params=pltpu.CompilerParams(
            dimension_semantics=("parallel",),   # megacore-shard M on v7x
            vmem_limit_bytes=vmem_limit,
        ),
        cost_estimate=cost,
    )(x2d, w1p, w2p)

    return out2d[:M, :d_model].reshape(B, S, d_model)


if __name__ == "__main__":
    # Small shapes consistent with the module's forward.
    batch, seq, d_model, d_ff = 2, 8, 32, 512

    key = jax.random.PRNGKey(0)
    kx, k1, k2 = jax.random.split(key, 3)

    x = jax.random.normal(kx, (batch, seq, d_model), dtype=jnp.float32)
    # Deterministic parameter init (shapes from nn.Linear(d_model,d_ff) etc.,
    # stored transposed so the kernel computes x @ W directly).
    w1 = jax.random.normal(k1, (d_model, d_ff), dtype=jnp.float32) * (1.0 / d_model) ** 0.5
    w2 = jax.random.normal(k2, (d_ff, d_model), dtype=jnp.float32) * (1.0 / d_ff) ** 0.5

    out = poswise_ffn(x, w1, w2)
    jax.block_until_ready(out)

    # Pure-JAX reference replicating the kernel's numerics: bf16 MXU operands,
    # f32 accumulation, residual add + LayerNorm in f32.
    bf = jnp.bfloat16
    xb = x.astype(bf).astype(jnp.float32)
    w1b = w1.astype(bf).astype(jnp.float32)
    w2b = w2.astype(bf).astype(jnp.float32)
    h = jnp.maximum(xb @ w1b, 0.0).astype(bf).astype(jnp.float32)
    y_ref = h @ w2b + x
    mean = jnp.mean(y_ref, axis=-1, keepdims=True)
    var = jnp.mean((y_ref - mean) ** 2, axis=-1, keepdims=True)
    ref = (y_ref - mean) * jax.lax.rsqrt(var + LN_EPS)

    assert jnp.allclose(out, ref, atol=2e-3, rtol=2e-3), "mismatch vs reference"

    print("KERNEL_OK")
</pallas_src>

<mosaic_0001>
module attributes {stable_mosaic.version = 11 : i64} {
  func.func @ffn_ln_kernel(%arg0: i32, %arg1: memref<16x128xf32, #tpu.memory_space<vmem>>, %arg2: memref<128x512xbf16, #tpu.memory_space<vmem>>, %arg3: memref<512x128xbf16, #tpu.memory_space<vmem>>, %arg4: memref<16x128xf32, #tpu.memory_space<vmem>>) attributes {dimension_semantics = [#tpu.dimension_semantics<parallel>], iteration_bounds = array<i64: 1>, scalar_prefetch = 0 : i64, scratch_operands = 0 : i64, tpu.core_type = #tpu.core_type<tc>, window_params = [{transform_indices = @transform_0, window_bounds = array<i64: 16, 128>}, {pipeline_mode = #tpu.pipeline_mode<synchronous>, transform_indices = @transform_1, window_bounds = array<i64: 128, 512>}, {pipeline_mode = #tpu.pipeline_mode<synchronous>, transform_indices = @transform_2, window_bounds = array<i64: 512, 128>}, {transform_indices = @transform_3, window_bounds = array<i64: 16, 128>}]} {
    %c0 = arith.constant 0 : index
    %c0_0 = arith.constant 0 : index
    %0 = vector.load %arg1[%c0, %c0_0] : memref<16x128xf32, #tpu.memory_space<vmem>>, vector<16x128xf32>
    %c0_1 = arith.constant 0 : index
    %c0_2 = arith.constant 0 : index
    %1 = vector.load %arg2[%c0_1, %c0_2] : memref<128x512xbf16, #tpu.memory_space<vmem>>, vector<128x512xbf16>
    %c0_3 = arith.constant 0 : index
    %c0_4 = arith.constant 0 : index
    %2 = vector.load %arg3[%c0_3, %c0_4] : memref<512x128xbf16, #tpu.memory_space<vmem>>, vector<512x128xbf16>
    %3 = arith.truncf %0 : vector<16x128xf32> to vector<16x128xbf16>
    %cst = arith.constant dense<0.000000e+00> : vector<16x512xf32>
    %4 = tpu.matmul %3, %1, %cst {dimension_numbers = #tpu.dot_dimension_numbers<[1], [0], [0], [1], [0, 0, 1, 1], [], []>} : vector<16x128xbf16>, vector<128x512xbf16>, vector<16x512xf32> -> vector<16x512xf32>
    %cst_5 = arith.constant 0.000000e+00 : f32
    %5 = vector.broadcast %cst_5 : f32 to vector<16x512xf32>
    %6 = arith.maximumf %4, %5 : vector<16x512xf32>
    %7 = arith.truncf %6 : vector<16x512xf32> to vector<16x512xbf16>
    %cst_6 = arith.constant dense<0.000000e+00> : vector<16x128xf32>
    %8 = tpu.matmul %7, %2, %cst_6 {dimension_numbers = #tpu.dot_dimension_numbers<[1], [0], [0], [1], [0, 0, 1, 1], [], []>} : vector<16x512xbf16>, vector<512x128xbf16>, vector<16x128xf32> -> vector<16x128xf32>
    %9 = arith.addf %8, %0 : vector<16x128xf32>
    %cst_7 = arith.constant dense<0.000000e+00> : vector<16xf32>
    %10 = vector.multi_reduction <add>, %9, %cst_7 [1] : vector<16x128xf32> to vector<16xf32>
    %11 = vector.shape_cast %10 : vector<16xf32> to vector<16x1xf32>
    %12 = arith.mulf %9, %9 : vector<16x128xf32>
    %cst_8 = arith.constant dense<0.000000e+00> : vector<16xf32>
    %13 = vector.multi_reduction <add>, %12, %cst_8 [1] : vector<16x128xf32> to vector<16xf32>
    %14 = vector.shape_cast %13 : vector<16xf32> to vector<16x1xf32>
    %cst_9 = arith.constant 3.125000e-02 : f32
    %15 = vector.broadcast %cst_9 : f32 to vector<16x1xf32>
    %16 = arith.mulf %11, %15 : vector<16x1xf32>
    %cst_10 = arith.constant 3.125000e-02 : f32
    %17 = vector.broadcast %cst_10 : f32 to vector<16x1xf32>
    %18 = arith.mulf %14, %17 : vector<16x1xf32>
    %19 = arith.mulf %16, %16 : vector<16x1xf32>
    %20 = arith.subf %18, %19 : vector<16x1xf32>
    %cst_11 = arith.constant 0.000000e+00 : f32
    %21 = vector.broadcast %cst_11 : f32 to vector<16x1xf32>
    %22 = arith.maximumf %20, %21 : vector<16x1xf32>
    %23 = vector.broadcast %16 : vector<16x1xf32> to vector<16x128xf32>
    %24 = arith.subf %9, %23 : vector<16x128xf32>
    %cst_12 = arith.constant 9.99999974E-6 : f32
    %25 = vector.broadcast %cst_12 : f32 to vector<16x1xf32>
    %26 = arith.addf %22, %25 : vector<16x1xf32>
    %27 = math.rsqrt %26 : vector<16x1xf32>
    %28 = vector.broadcast %27 : vector<16x1xf32> to vector<16x128xf32>
    %29 = arith.mulf %24, %28 : vector<16x128xf32>
    %c0_13 = arith.constant 0 : index
    %c0_14 = arith.constant 0 : index
    %30 = vector.load %arg4[%c0_13, %c0_14] : memref<16x128xf32, #tpu.memory_space<vmem>>, vector<16x128xf32>
    tpu.vector_store %arg4[%c0_13, %c0_14], %29 {strides = array<i32>} : memref<16x128xf32, #tpu.memory_space<vmem>>, vector<16x128xf32>,
    return
  }
  func.func @transform_0(%arg0: i32) -> (i32, i32) {
    %c0_i32 = arith.constant 0 : i32
    %c0_i32_0 = arith.constant 0 : i32
    return %arg0, %c0_i32 : i32, i32
  }
  func.func @transform_1(%arg0: i32) -> (i32, i32) {
    %c0_i32 = arith.constant 0 : i32
    %c0_i32_0 = arith.constant 0 : i32
    %c0_i32_1 = arith.constant 0 : i32
    return %c0_i32, %c0_i32_0 : i32, i32
  }
  func.func @transform_2(%arg0: i32) -> (i32, i32) {
    %c0_i32 = arith.constant 0 : i32
    %c0_i32_0 = arith.constant 0 : i32
    %c0_i32_1 = arith.constant 0 : i32
    return %c0_i32, %c0_i32_0 : i32, i32
  }
  func.func @transform_3(%arg0: i32) -> (i32, i32) {
    %c0_i32 = arith.constant 0 : i32
    %c0_i32_0 = arith.constant 0 : i32
    return %arg0, %c0_i32 : i32, i32
  }
}

</mosaic_0001>

<llo_original>
// kernel: tpu_custom_call.1
$region0: #{tpu_custom_call.1}
  #allocation0 [shape = 'u32[]', space=smem, size = 0x4, offset = 0x4, fixed_abs, tag = 'smem constant byte address 0x4 - core index']
  #allocation1 [shape = 'u32[144,128]{1,0:T(1,128)}', space=vmem, size = 0x12000, scoped, tag = 'internal scratch']
  %s0 = inlined_call_operand.hbm [shape: f32[16,128], index: 0, kind: input, shape index: {}]
  %s1 = inlined_call_operand.hbm [shape: bf16[128,512], index: 1, kind: input, shape index: {}]
  %s2 = inlined_call_operand.hbm [shape: bf16[512,128], index: 2, kind: input, shape index: {}]
  %s3 = inlined_call_operand.hbm [shape: f32[16,128], index: 3, kind: output, shape index: {}]
  %s4 = sld [smem:[#allocation0]]
  $region34: #{tpu_custom_call.1} parent=0
    _
  %s6 = ssub.s32 1, %s4
  %s7 = scalar_select 0, %s6, %s4
  $region1: #{tpu_custom_call.1} parent=0
    #allocation2 [shape = 'u8[8192]{0}', space=vmem, size = 0x2000, scoped, tag = 'input window, operand 0, single buffered']
    #allocation3 [shape = 's32[1]{0}', space=sflag, size = 0x4, scoped, tag = 'scoped memory for tpu_custom_call.1']
    #allocation4 [shape = 's32[1]{0}', space=sflag, size = 0x4, scoped, tag = 'scoped memory for tpu_custom_call.1']
    #allocation5 [shape = 'u8[131072]{0}', space=vmem, size = 0x20000, scoped, tag = 'input window, operand 1, single buffered']
    #allocation6 [shape = 's32[1]{0}', space=sflag, size = 0x4, scoped, tag = 'scoped memory for tpu_custom_call.1']
    #allocation7 [shape = 'u8[131072]{0}', space=vmem, size = 0x20000, scoped, tag = 'input window, operand 2, single buffered']
    #allocation8 [shape = 'u8[8192]{0}', space=vmem, size = 0x2000, scoped, tag = 'output window, operand 0, single buffered']
    %8 = vsyncpa [#allocation3], 0
    %9 = vsyncpa [#allocation6], 0
    %10 = vsyncpa [#allocation4], 0
    // Predicated region
    $region2: #{tpu_custom_call.1} parent=1 // pred_check
      _
    $region3: #{tpu_custom_call.1} parent=1 // pred_check_branch
      %12 = sbr.rel (0) target = $region5
    $region4: #{tpu_custom_call.1} parent=1 // pred_region
      %s14 = ssub.s32 256, 256
      %15 = vsyncadd [#allocation3], %s14
      %s16 = sshll.u32 [#allocation2], 4
      %s17 = int_to_ptr.vmem [resolvable:$true] %s16
      %22 = dma.hbm_to_vmem [thread:$0]  %s0, 256, %s17, [#allocation3], 128, 128, 8
    $region5: #{tpu_custom_call.1} parent=1 // pred_fallthru
      _
    // Predicated region
    $region6: #{tpu_custom_call.1} parent=1 // pred_check
      _
    $region7: #{tpu_custom_call.1} parent=1 // pred_check_branch
      %24 = sbr.rel (0) target = $region9
    $region8: #{tpu_custom_call.1} parent=1 // pred_region
      %s26 = ssub.s32 4096, 4096
      %27 = vsyncadd [#allocation6], %s26
      %s28 = sshll.u32 [#allocation5], 4
      %s29 = int_to_ptr.vmem [resolvable:$true] %s28
      %34 = dma.hbm_to_vmem [thread:$0]  %s1, 4096, %s29, [#allocation6], 256, 256, 16
    $region9: #{tpu_custom_call.1} parent=1 // pred_fallthru
      _
    // Predicated region
    $region10: #{tpu_custom_call.1} parent=1 // pred_check
      _
    $region11: #{tpu_custom_call.1} parent=1 // pred_check_branch
      %36 = sbr.rel (0) target = $region13
    $region12: #{tpu_custom_call.1} parent=1 // pred_region
      %s38 = ssub.s32 4096, 4096
      %39 = vsyncadd [#allocation6], %s38
      %s40 = sshll.u32 [#allocation7], 4
      %s41 = int_to_ptr.vmem [resolvable:$true] %s40
      %46 = dma.hbm_to_vmem [thread:$0]  %s2, 4096, %s41, [#allocation6], 64, 64, 4
    $region13: #{tpu_custom_call.1} parent=1 // pred_fallthru
      _
    // Predicated region
    $region14: #{tpu_custom_call.1} parent=1 // pred_check
      _
    $region15: #{tpu_custom_call.1} parent=1 // pred_check_branch
      %48 = sbr.rel (0) target = $region17
    $region16: #{tpu_custom_call.1} parent=1 // pred_region
      %49 = dma.done [#allocation3], 256
    $region17: #{tpu_custom_call.1} parent=1 // pred_fallthru
      _
    // Predicated region
    $region18: #{tpu_custom_call.1} parent=1 // pred_check
      _
    $region19: #{tpu_custom_call.1} parent=1 // pred_check_branch
      %51 = sbr.rel (0) target = $region21
    $region20: #{tpu_custom_call.1} parent=1 // pred_region
      %52 = dma.done [#allocation6], 4096
    $region21: #{tpu_custom_call.1} parent=1 // pred_fallthru
      _
    // Predicated region
    $region22: #{tpu_custom_call.1} parent=1 // pred_check
      _
    $region23: #{tpu_custom_call.1} parent=1 // pred_check_branch
      %54 = sbr.rel (0) target = $region25
    $region24: #{tpu_custom_call.1} parent=1 // pred_region
      %55 = dma.done [#allocation6], 4096
    $region25: #{tpu_custom_call.1} parent=1 // pred_fallthru
      _
    %v57 = vld [vmem:[#allocation2] sm:$0xff]
    %v58 = vld [vmem:[#allocation2 + $0x8] sm:$0xff]
    %v59 = vld [vmem:[#allocation5] sm:$0xff]
    %v60 = vld [vmem:[#allocation5 + $0x8] sm:$0xff]
    %v61 = vld [vmem:[#allocation5 + $0x10] sm:$0xff]
    %v62 = vld [vmem:[#allocation5 + $0x18] sm:$0xff]
    %v63 = vld [vmem:[#allocation5 + $0x20] sm:$0xff]
    %v64 = vld [vmem:[#allocation5 + $0x28] sm:$0xff]
    %v65 = vld [vmem:[#allocation5 + $0x30] sm:$0xff]
    %v66 = vld [vmem:[#allocation5 + $0x38] sm:$0xff]
    %v67 = vld [vmem:[#allocation5 + $0x40] sm:$0xff]
    %v68 = vld [vmem:[#allocation5 + $0x48] sm:$0xff]
    %v69 = vld [vmem:[#allocation5 + $0x50] sm:$0xff]
    %v70 = vld [vmem:[#allocation5 + $0x58] sm:$0xff]
    %v71 = vld [vmem:[#allocation5 + $0x60] sm:$0xff]
    %v72 = vld [vmem:[#allocation5 + $0x68] sm:$0xff]
    %v73 = vld [vmem:[#allocation5 + $0x70] sm:$0xff]
    %v74 = vld [vmem:[#allocation5 + $0x78] sm:$0xff]
    %v75 = vld [vmem:[#allocation5 + $0x80] sm:$0xff]
    %v76 = vld [vmem:[#allocation5 + $0x88] sm:$0xff]
    %v77 = vld [vmem:[#allocation5 + $0x90] sm:$0xff]
    %v78 = vld [vmem:[#allocation5 + $0x98] sm:$0xff]
    %v79 = vld [vmem:[#allocation5 + $0xa0] sm:$0xff]
    %v80 = vld [vmem:[#allocation5 + $0xa8] sm:$0xff]
    %v81 = vld [vmem:[#allocation5 + $0xb0] sm:$0xff]
    %v82 = vld [vmem:[#allocation5 + $0xb8] sm:$0xff]
    %v83 = vld [vmem:[#allocation5 + $0xc0] sm:$0xff]
    %v84 = vld [vmem:[#allocation5 + $0xc8] sm:$0xff]
    %v85 = vld [vmem:[#allocation5 + $0xd0] sm:$0xff]
    %v86 = vld [vmem:[#allocation5 + $0xd8] sm:$0xff]
    %v87 = vld [vmem:[#allocation5 + $0xe0] sm:$0xff]
    %v88 = vld [vmem:[#allocation5 + $0xe8] sm:$0xff]
    %v89 = vld [vmem:[#allocation5 + $0xf0] sm:$0xff]
    %v90 = vld [vmem:[#allocation5 + $0xf8] sm:$0xff]
    %v91 = vld [vmem:[#allocation7] sm:$0xf]
    %v92 = vld [vmem:[#allocation7 + $0x4] sm:$0xf]
    %v93 = vld [vmem:[#allocation7 + $0x8] sm:$0xf]
    %v94 = vld [vmem:[#allocation7 + $0xc] sm:$0xf]
    %v95 = vld [vmem:[#allocation7 + $0x10] sm:$0xf]
    %v96 = vld [vmem:[#allocation7 + $0x14] sm:$0xf]
    %v97 = vld [vmem:[#allocation7 + $0x18] sm:$0xf]
    %v98 = vld [vmem:[#allocation7 + $0x1c] sm:$0xf]
    %v99 = vld [vmem:[#allocation7 + $0x20] sm:$0xf]
    %v100 = vld [vmem:[#allocation7 + $0x24] sm:$0xf]
    %v101 = vld [vmem:[#allocation7 + $0x28] sm:$0xf]
    %v102 = vld [vmem:[#allocation7 + $0x2c] sm:$0xf]
    %v103 = vld [vmem:[#allocation7 + $0x30] sm:$0xf]
    %v104 = vld [vmem:[#allocation7 + $0x34] sm:$0xf]
    %v105 = vld [vmem:[#allocation7 + $0x38] sm:$0xf]
    %v106 = vld [vmem:[#allocation7 + $0x3c] sm:$0xf]
    %v107 = vld [vmem:[#allocation7 + $0x40] sm:$0xf]
    %v108 = vld [vmem:[#allocation7 + $0x44] sm:$0xf]
    %v109 = vld [vmem:[#allocation7 + $0x48] sm:$0xf]
    %v110 = vld [vmem:[#allocation7 + $0x4c] sm:$0xf]
    %v111 = vld [vmem:[#allocation7 + $0x50] sm:$0xf]
    %v112 = vld [vmem:[#allocation7 + $0x54] sm:$0xf]
    %v113 = vld [vmem:[#allocation7 + $0x58] sm:$0xf]
    %v114 = vld [vmem:[#allocation7 + $0x5c] sm:$0xf]
    %v115 = vld [vmem:[#allocation7 + $0x60] sm:$0xf]
    %v116 = vld [vmem:[#allocation7 + $0x64] sm:$0xf]
    %v117 = vld [vmem:[#allocation7 + $0x68] sm:$0xf]
    %v118 = vld [vmem:[#allocation7 + $0x6c] sm:$0xf]
    %v119 = vld [vmem:[#allocation7 + $0x70] sm:$0xf]
    %v120 = vld [vmem:[#allocation7 + $0x74] sm:$0xf]
    %v121 = vld [vmem:[#allocation7 + $0x78] sm:$0xf]
    %v122 = vld [vmem:[#allocation7 + $0x7c] sm:$0xf]
    %v123 = vld [vmem:[#allocation7 + $0x80] sm:$0xf]
    %v124 = vld [vmem:[#allocation7 + $0x84] sm:$0xf]
    %v125 = vld [vmem:[#allocation7 + $0x88] sm:$0xf]
    %v126 = vld [vmem:[#allocation7 + $0x8c] sm:$0xf]
    %v127 = vld [vmem:[#allocation7 + $0x90] sm:$0xf]
    %v128 = vld [vmem:[#allocation7 + $0x94] sm:$0xf]
    %v129 = vld [vmem:[#allocation7 + $0x98] sm:$0xf]
    %v130 = vld [vmem:[#allocation7 + $0x9c] sm:$0xf]
    %v131 = vld [vmem:[#allocation7 + $0xa0] sm:$0xf]
    %v132 = vld [vmem:[#allocation7 + $0xa4] sm:$0xf]
    %v133 = vld [vmem:[#allocation7 + $0xa8] sm:$0xf]
    %v134 = vld [vmem:[#allocation7 + $0xac] sm:$0xf]
    %v135 = vld [vmem:[#allocation7 + $0xb0] sm:$0xf]
    %v136 = vld [vmem:[#allocation7 + $0xb4] sm:$0xf]
    %v137 = vld [vmem:[#allocation7 + $0xb8] sm:$0xf]
    %v138 = vld [vmem:[#allocation7 + $0xbc] sm:$0xf]
    %v139 = vld [vmem:[#allocation7 + $0xc0] sm:$0xf]
    %v140 = vld [vmem:[#allocation7 + $0xc4] sm:$0xf]
    %v141 = vld [vmem:[#allocation7 + $0xc8] sm:$0xf]
    %v142 = vld [vmem:[#allocation7 + $0xcc] sm:$0xf]
    %v143 = vld [vmem:[#allocation7 + $0xd0] sm:$0xf]
    %v144 = vld [vmem:[#allocation7 + $0xd4] sm:$0xf]
    %v145 = vld [vmem:[#allocation7 + $0xd8] sm:$0xf]
    %v146 = vld [vmem:[#allocation7 + $0xdc] sm:$0xf]
    %v147 = vld [vmem:[#allocation7 + $0xe0] sm:$0xf]
    %v148 = vld [vmem:[#allocation7 + $0xe4] sm:$0xf]
    %v149 = vld [vmem:[#allocation7 + $0xe8] sm:$0xf]
    %v150 = vld [vmem:[#allocation7 + $0xec] sm:$0xf]
    %v151 = vld [vmem:[#allocation7 + $0xf0] sm:$0xf]
    %v152 = vld [vmem:[#allocation7 + $0xf4] sm:$0xf]
    %v153 = vld [vmem:[#allocation7 + $0xf8] sm:$0xf]
    %v154 = vld [vmem:[#allocation7 + $0xfc] sm:$0xf]
    %v155 = vpack.c.bf16 %v58, %v57
    %v188 = vunpack.c.l.b16 %v59
    %v189 = vunpack.c.h.b16 %v59
    %v190 = vunpack.c.l.b16 %v60
    %v191 = vunpack.c.h.b16 %v60
    %v192 = vunpack.c.l.b16 %v61
    %v193 = vunpack.c.h.b16 %v61
    %v194 = vunpack.c.l.b16 %v62
    %v195 = vunpack.c.h.b16 %v62
    %v196 = vunpack.c.l.b16 %v63
    %v197 = vunpack.c.h.b16 %v63
    %v198 = vunpack.c.l.b16 %v64
    %v199 = vunpack.c.h.b16 %v64
    %v200 = vunpack.c.l.b16 %v65
    %v201 = vunpack.c.h.b16 %v65
    %v202 = vunpack.c.l.b16 %v66
    %v203 = vunpack.c.h.b16 %v66
    %v204 = vunpack.c.l.b16 %v67
    %v205 = vunpack.c.h.b16 %v67
    %v206 = vunpack.c.l.b16 %v68
    %v207 = vunpack.c.h.b16 %v68
    %v208 = vunpack.c.l.b16 %v69
    %v209 = vunpack.c.h.b16 %v69
    %v210 = vunpack.c.l.b16 %v70
    %v211 = vunpack.c.h.b16 %v70
    %v212 = vunpack.c.l.b16 %v71
    %v213 = vunpack.c.h.b16 %v71
    %v214 = vunpack.c.l.b16 %v72
    %v215 = vunpack.c.h.b16 %v72
    %v216 = vunpack.c.l.b16 %v73
    %v217 = vunpack.c.h.b16 %v73
    %v218 = vunpack.c.l.b16 %v74
    %v219 = vunpack.c.h.b16 %v74
    %v220 = vunpack.c.l.b16 %v75
    %v221 = vunpack.c.h.b16 %v75
    %v222 = vunpack.c.l.b16 %v76
    %v223 = vunpack.c.h.b16 %v76
    %v224 = vunpack.c.l.b16 %v77
    %v225 = vunpack.c.h.b16 %v77
    %v226 = vunpack.c.l.b16 %v78
    %v227 = vunpack.c.h.b16 %v78
    %v228 = vunpack.c.l.b16 %v79
    %v229 = vunpack.c.h.b16 %v79
    %v230 = vunpack.c.l.b16 %v80
    %v231 = vunpack.c.h.b16 %v80
    %v232 = vunpack.c.l.b16 %v81
    %v233 = vunpack.c.h.b16 %v81
    %v234 = vunpack.c.l.b16 %v82
    %v235 = vunpack.c.h.b16 %v82
    %v236 = vunpack.c.l.b16 %v83
    %v237 = vunpack.c.h.b16 %v83
    %v238 = vunpack.c.l.b16 %v84
    %v239 = vunpack.c.h.b16 %v84
    %v240 = vunpack.c.l.b16 %v85
    %v241 = vunpack.c.h.b16 %v85
    %v242 = vunpack.c.l.b16 %v86
    %v243 = vunpack.c.h.b16 %v86
    %v244 = vunpack.c.l.b16 %v87
    %v245 = vunpack.c.h.b16 %v87
    %v246 = vunpack.c.l.b16 %v88
    %v247 = vunpack.c.h.b16 %v88
    %v248 = vunpack.c.l.b16 %v89
    %v249 = vunpack.c.h.b16 %v89
    %v250 = vunpack.c.l.b16 %v90
    %v251 = vunpack.c.h.b16 %v90
    %v252 = vpack.c.b16 %v192, %v188
    %v253 = vpack.c.b16 %v193, %v189
    %v254 = vpack.c.b16 %v194, %v190
    %v255 = vpack.c.b16 %v195, %v191
    %v256 = vpack.c.b16 %v200, %v196
    %v257 = vpack.c.b16 %v201, %v197
    %v258 = vpack.c.b16 %v202, %v198
    %v259 = vpack.c.b16 %v203, %v199
    %v260 = vpack.c.b16 %v208, %v204
    %v261 = vpack.c.b16 %v209, %v205
    %v262 = vpack.c.b16 %v210, %v206
    %v263 = vpack.c.b16 %v211, %v207
    %v264 = vpack.c.b16 %v216, %v212
    %v265 = vpack.c.b16 %v217, %v213
    %v266 = vpack.c.b16 %v218, %v214
    %v267 = vpack.c.b16 %v219, %v215
    %v268 = vpack.c.b16 %v224, %v220
    %v269 = vpack.c.b16 %v225, %v221
    %v270 = vpack.c.b16 %v226, %v222
    %v271 = vpack.c.b16 %v227, %v223
    %v272 = vpack.c.b16 %v232, %v228
    %v273 = vpack.c.b16 %v233, %v229
    %v274 = vpack.c.b16 %v234, %v230
    %v275 = vpack.c.b16 %v235, %v231
    %v276 = vpack.c.b16 %v240, %v236
    %v277 = vpack.c.b16 %v241, %v237
    %v278 = vpack.c.b16 %v242, %v238
    %v279 = vpack.c.b16 %v243, %v239
    %v280 = vpack.c.b16 %v248, %v244
    %v281 = vpack.c.b16 %v249, %v245
    %v282 = vpack.c.b16 %v250, %v246
    %v283 = vpack.c.b16 %v251, %v247
    %316 = vmatprep.subr.bf16.mxu0 %v253
    %317 = vmatpush1.bf16.msra.mxu0 %v252
    %318 = vmatprep.subr.bf16.mxu0 %v257
    %319 = vmatpush1.bf16.msra.mxu0 %v256
    %320 = vmatprep.subr.bf16.mxu0 %v261
    %321 = vmatpush1.bf16.msra.mxu0 %v260
    %322 = vmatprep.subr.bf16.mxu0 %v265
    %323 = vmatpush1.bf16.msra.mxu0 %v264
    %324 = vmatprep.subr.bf16.mxu0 %v269
    %325 = vmatpush1.bf16.msra.mxu0 %v268
    %326 = vmatprep.subr.bf16.mxu0 %v273
    %327 = vmatpush1.bf16.msra.mxu0 %v272
    %328 = vmatprep.subr.bf16.mxu0 %v277
    %329 = vmatpush1.bf16.msra.mxu0 %v276
    %330 = vmatprep.subr.bf16.mxu0 %v281
    %331 = vmatpush1.bf16.msra.mxu0 %v280
    %332 = vmatprep.subr.bf16.mxu0 0
    %333 = vmatpush1.bf16.msra.mxu0 0
    %334 = vmatprep.subr.bf16.mxu0 0
    %335 = vmatpush1.bf16.msra.mxu0 0
    %336 = vmatprep.subr.bf16.mxu0 0
    %337 = vmatpush1.bf16.msra.mxu0 0
    %338 = vmatprep.subr.bf16.mxu0 0
    %339 = vmatpush1.bf16.msra.mxu0 0
    %340 = vmatprep.subr.bf16.mxu0 0
    %341 = vmatpush1.bf16.msra.mxu0 0
    %342 = vmatprep.subr.bf16.mxu0 0
    %343 = vmatpush1.bf16.msra.mxu0 0
    %344 = vmatprep.subr.bf16.mxu0 0
    %345 = vmatpush1.bf16.msra.mxu0 0
    %346 = vmatprep.subr.bf16.mxu0 0
    %347 = vmatpush1.bf16.msra.mxu0 0
    %348 = vmatprep.mubr.bf16.mxu0 0
    %349 = vmatmul.mubr.bf16.gmra.mrb[0].mxu0 %v155
    %v350 = vpop.f32.mrb[0].mxu0
    %v351 = vadd.f32 0.0, %v350
    %v352 = vpop.f32.mrb[0].mxu0
    %v353 = vadd.f32 0.0, %v352
    %v354 = vpop.f32.mrb[0].mxu0
    %v355 = vadd.f32 0.0, %v354
    %v356 = vpop.f32.mrb[0].mxu0
    %v357 = vadd.f32 0.0, %v356
    %358 = vdwg.mxu0
    %359 = vmatprep.subr.bf16.mxu0 %v255
    %360 = vmatpush1.bf16.msra.mxu0 %v254
    %361 = vmatprep.subr.bf16.mxu0 %v259
    %362 = vmatpush1.bf16.msra.mxu0 %v258
    %363 = vmatprep.subr.bf16.mxu0 %v263
    %364 = vmatpush1.bf16.msra.mxu0 %v262
    %365 = vmatprep.subr.bf16.mxu0 %v267
    %366 = vmatpush1.bf16.msra.mxu0 %v266
    %367 = vmatprep.subr.bf16.mxu0 %v271
    %368 = vmatpush1.bf16.msra.mxu0 %v270
    %369 = vmatprep.subr.bf16.mxu0 %v275
    %370 = vmatpush1.bf16.msra.mxu0 %v274
    %371 = vmatprep.subr.bf16.mxu0 %v279
    %372 = vmatpush1.bf16.msra.mxu0 %v278
    %373 = vmatprep.subr.bf16.mxu0 %v283
    %374 = vmatpush1.bf16.msra.mxu0 %v282
    %375 = vmatprep.subr.bf16.mxu0 0
    %376 = vmatpush1.bf16.msra.mxu0 0
    %377 = vmatprep.subr.bf16.mxu0 0
    %378 = vmatpush1.bf16.msra.mxu0 0
    %379 = vmatprep.subr.bf16.mxu0 0
    %380 = vmatpush1.bf16.msra.mxu0 0
    %381 = vmatprep.subr.bf16.mxu0 0
    %382 = vmatpush1.bf16.msra.mxu0 0
    %383 = vmatprep.subr.bf16.mxu0 0
    %384 = vmatpush1.bf16.msra.mxu0 0
    %385 = vmatprep.subr.bf16.mxu0 0
    %386 = vmatpush1.bf16.msra.mxu0 0
    %387 = vmatprep.subr.bf16.mxu0 0
    %388 = vmatpush1.bf16.msra.mxu0 0
    %389 = vmatprep.subr.bf16.mxu0 0
    %390 = vmatpush1.bf16.msra.mxu0 0
    %391 = vmatprep.mubr.bf16.mxu0 0
    %392 = vmatmul.mubr.bf16.gmra.mrb[0].mxu0 %v155
    %v393 = vpop.f32.mrb[0].mxu0
    %v394 = vadd.f32 0.0, %v393
    %v395 = vpop.f32.mrb[0].mxu0
    %v396 = vadd.f32 0.0, %v395
    %v397 = vpop.f32.mrb[0].mxu0
    %v398 = vadd.f32 0.0, %v397
    %v399 = vpop.f32.mrb[0].mxu0
    %v400 = vadd.f32 0.0, %v399
    %401 = vdwg.mxu0
    %v402 = vmax.f32 %v351, 0.0
    %v403 = vmax.f32 %v353, 0.0
    %v404 = vmax.f32 %v394, 0.0
    %v405 = vmax.f32 %v396, 0.0
    %v406 = vmax.f32 %v355, 0.0
    %v407 = vmax.f32 %v357, 0.0
    %v408 = vmax.f32 %v398, 0.0
    %v409 = vmax.f32 %v400, 0.0
    %v410 = vpack.c.bf16 %v406, %v402
    %v411 = vpack.c.bf16 %v407, %v403
    %v412 = vpack.c.bf16 %v408, %v404
    %v413 = vpack.c.bf16 %v409, %v405
    %v478 = vunpack.c.l.b16 %v91
    %v479 = vunpack.c.l.b16 %v92
    %v480 = vunpack.c.l.b16 %v93
    %v481 = vunpack.c.l.b16 %v94
    %v482 = vunpack.c.l.b16 %v95
    %v483 = vunpack.c.l.b16 %v96
    %v484 = vunpack.c.l.b16 %v97
    %v485 = vunpack.c.l.b16 %v98
    %v486 = vunpack.c.l.b16 %v99
    %v487 = vunpack.c.l.b16 %v100
    %v488 = vunpack.c.l.b16 %v101
    %v489 = vunpack.c.l.b16 %v102
    %v490 = vunpack.c.l.b16 %v103
    %v491 = vunpack.c.l.b16 %v104
    %v492 = vunpack.c.l.b16 %v105
    %v493 = vunpack.c.l.b16 %v106
    %v494 = vunpack.c.l.b16 %v107
    %v495 = vunpack.c.l.b16 %v108
    %v496 = vunpack.c.l.b16 %v109
    %v497 = vunpack.c.l.b16 %v110
    %v498 = vunpack.c.l.b16 %v111
    %v499 = vunpack.c.l.b16 %v112
    %v500 = vunpack.c.l.b16 %v113
    %v501 = vunpack.c.l.b16 %v114
    %v502 = vunpack.c.l.b16 %v115
    %v503 = vunpack.c.l.b16 %v116
    %v504 = vunpack.c.l.b16 %v117
    %v505 = vunpack.c.l.b16 %v118
    %v506 = vunpack.c.l.b16 %v119
    %v507 = vunpack.c.l.b16 %v120
    %v508 = vunpack.c.l.b16 %v121
    %v509 = vunpack.c.l.b16 %v122
    %v510 = vunpack.c.l.b16 %v123
    %v511 = vunpack.c.l.b16 %v124
    %v512 = vunpack.c.l.b16 %v125
    %v513 = vunpack.c.l.b16 %v126
    %v514 = vunpack.c.l.b16 %v127
    %v515 = vunpack.c.l.b16 %v128
    %v516 = vunpack.c.l.b16 %v129
    %v517 = vunpack.c.l.b16 %v130
    %v518 = vunpack.c.l.b16 %v131
    %v519 = vunpack.c.l.b16 %v132
    %v520 = vunpack.c.l.b16 %v133
    %v521 = vunpack.c.l.b16 %v134
    %v522 = vunpack.c.l.b16 %v135
    %v523 = vunpack.c.l.b16 %v136
    %v524 = vunpack.c.l.b16 %v137
    %v525 = vunpack.c.l.b16 %v138
    %v526 = vunpack.c.l.b16 %v139
    %v527 = vunpack.c.l.b16 %v140
    %v528 = vunpack.c.l.b16 %v141
    %v529 = vunpack.c.l.b16 %v142
    %v530 = vunpack.c.l.b16 %v143
    %v531 = vunpack.c.l.b16 %v144
    %v532 = vunpack.c.l.b16 %v145
    %v533 = vunpack.c.l.b16 %v146
    %v534 = vunpack.c.l.b16 %v147
    %v535 = vunpack.c.l.b16 %v148
    %v536 = vunpack.c.l.b16 %v149
    %v537 = vunpack.c.l.b16 %v150
    %v538 = vunpack.c.l.b16 %v151
    %v539 = vunpack.c.l.b16 %v152
    %v540 = vunpack.c.l.b16 %v153
    %v541 = vunpack.c.l.b16 %v154
    %v542 = vpack.c.b16 %v479, %v478
    %v543 = vpack.c.b16 %v481, %v480
    %v544 = vpack.c.b16 %v483, %v482
    %v545 = vpack.c.b16 %v485, %v484
    %v546 = vpack.c.b16 %v487, %v486
    %v547 = vpack.c.b16 %v489, %v488
    %v548 = vpack.c.b16 %v491, %v490
    %v549 = vpack.c.b16 %v493, %v492
    %v550 = vpack.c.b16 %v495, %v494
    %v551 = vpack.c.b16 %v497, %v496
    %v552 = vpack.c.b16 %v499, %v498
    %v553 = vpack.c.b16 %v501, %v500
    %v554 = vpack.c.b16 %v503, %v502
    %v555 = vpack.c.b16 %v505, %v504
    %v556 = vpack.c.b16 %v507, %v506
    %v557 = vpack.c.b16 %v509, %v508
    %v558 = vpack.c.b16 %v511, %v510
    %v559 = vpack.c.b16 %v513, %v512
    %v560 = vpack.c.b16 %v515, %v514
    %v561 = vpack.c.b16 %v517, %v516
    %v562 = vpack.c.b16 %v519, %v518
    %v563 = vpack.c.b16 %v521, %v520
    %v564 = vpack.c.b16 %v523, %v522
    %v565 = vpack.c.b16 %v525, %v524
    %v566 = vpack.c.b16 %v527, %v526
    %v567 = vpack.c.b16 %v529, %v528
    %v568 = vpack.c.b16 %v531, %v530
    %v569 = vpack.c.b16 %v533, %v532
    %v570 = vpack.c.b16 %v535, %v534
    %v571 = vpack.c.b16 %v537, %v536
    %v572 = vpack.c.b16 %v539, %v538
    %v573 = vpack.c.b16 %v541, %v540
    %606 = vmatprep.subr.bf16.mxu0 0
    %607 = vmatpush1.bf16.msra.mxu0 %v542
    %608 = vmatprep.subr.bf16.mxu0 0
    %609 = vmatpush1.bf16.msra.mxu0 %v543
    %610 = vmatprep.subr.bf16.mxu0 0
    %611 = vmatpush1.bf16.msra.mxu0 %v544
    %612 = vmatprep.subr.bf16.mxu0 0
    %613 = vmatpush1.bf16.msra.mxu0 %v545
    %614 = vmatprep.subr.bf16.mxu0 0
    %615 = vmatpush1.bf16.msra.mxu0 %v546
    %616 = vmatprep.subr.bf16.mxu0 0
    %617 = vmatpush1.bf16.msra.mxu0 %v547
    %618 = vmatprep.subr.bf16.mxu0 0
    %619 = vmatpush1.bf16.msra.mxu0 %v548
    %620 = vmatprep.subr.bf16.mxu0 0
    %621 = vmatpush1.bf16.msra.mxu0 %v549
    %622 = vmatprep.subr.bf16.mxu0 0
    %623 = vmatpush1.bf16.msra.mxu0 %v550
    %624 = vmatprep.subr.bf16.mxu0 0
    %625 = vmatpush1.bf16.msra.mxu0 %v551
    %626 = vmatprep.subr.bf16.mxu0 0
    %627 = vmatpush1.bf16.msra.mxu0 %v552
    %628 = vmatprep.subr.bf16.mxu0 0
    %629 = vmatpush1.bf16.msra.mxu0 %v553
    %630 = vmatprep.subr.bf16.mxu0 0
    %631 = vmatpush1.bf16.msra.mxu0 %v554
    %632 = vmatprep.subr.bf16.mxu0 0
    %633 = vmatpush1.bf16.msra.mxu0 %v555
    %634 = vmatprep.subr.bf16.mxu0 0
    %635 = vmatpush1.bf16.msra.mxu0 %v556
    %636 = vmatprep.subr.bf16.mxu0 0
    %637 = vmatpush1.bf16.msra.mxu0 %v557
    %638 = vmatprep.mubr.bf16.mxu0 %v411
    %639 = vmatmul.mubr.bf16.gmra.mrb[0].mxu0 %v410
    %v640 = vpop.f32.mrb[0].mxu0
    %v641 = vadd.f32 %v57, %v640
    %v642 = vpop.f32.mrb[0].mxu0
    %v643 = vpop.f32.mrb[0].mxu0
    %v644 = vadd.f32 %v58, %v643
    %v645 = vpop.f32.mrb[0].mxu0
    %646 = vdwg.mxu0
    %647 = vmatprep.subr.bf16.mxu0 0
    %648 = vmatpush1.bf16.msra.mxu0 %v558
    %649 = vmatprep.subr.bf16.mxu0 0
    %650 = vmatpush1.bf16.msra.mxu0 %v559
    %651 = vmatprep.subr.bf16.mxu0 0
    %652 = vmatpush1.bf16.msra.mxu0 %v560
    %653 = vmatprep.subr.bf16.mxu0 0
    %654 = vmatpush1.bf16.msra.mxu0 %v561
    %655 = vmatprep.subr.bf16.mxu0 0
    %656 = vmatpush1.bf16.msra.mxu0 %v562
    %657 = vmatprep.subr.bf16.mxu0 0
    %658 = vmatpush1.bf16.msra.mxu0 %v563
    %659 = vmatprep.subr.bf16.mxu0 0
    %660 = vmatpush1.bf16.msra.mxu0 %v564
    %661 = vmatprep.subr.bf16.mxu0 0
    %662 = vmatpush1.bf16.msra.mxu0 %v565
    %663 = vmatprep.subr.bf16.mxu0 0
    %664 = vmatpush1.bf16.msra.mxu0 %v566
    %665 = vmatprep.subr.bf16.mxu0 0
    %666 = vmatpush1.bf16.msra.mxu0 %v567
    %667 = vmatprep.subr.bf16.mxu0 0
    %668 = vmatpush1.bf16.msra.mxu0 %v568
    %669 = vmatprep.subr.bf16.mxu0 0
    %670 = vmatpush1.bf16.msra.mxu0 %v569
    %671 = vmatprep.subr.bf16.mxu0 0
    %672 = vmatpush1.bf16.msra.mxu0 %v570
    %673 = vmatprep.subr.bf16.mxu0 0
    %674 = vmatpush1.bf16.msra.mxu0 %v571
    %675 = vmatprep.subr.bf16.mxu0 0
    %676 = vmatpush1.bf16.msra.mxu0 %v572
    %677 = vmatprep.subr.bf16.mxu0 0
    %678 = vmatpush1.bf16.msra.mxu0 %v573
    %679 = vmatprep.mubr.bf16.mxu0 %v413
    %680 = vmatmul.mubr.bf16.gmra.mrb[0].mxu0 %v412
    %v681 = vpop.f32.mrb[0].mxu0
    %v682 = vadd.f32 %v641, %v681
    %v683 = vpop.f32.mrb[0].mxu0
    %v684 = vpop.f32.mrb[0].mxu0
    %v685 = vadd.f32 %v644, %v684
    %v686 = vpop.f32.mrb[0].mxu0
    %687 = vdwg.mxu0
    %688 = vadd.xlane.f32.xlu0 %v682
    %v689 = vpop.xlane.xlu0 %688
    %690 = vadd.xlane.f32.xlu0 %v685
    %v691 = vpop.xlane.xlu0 %690
    %v692 = vmul.f32 %v682, %v682
    %v693 = vmul.f32 %v685, %v685
    %694 = vadd.xlane.f32.xlu0 %v692
    %v695 = vpop.xlane.xlu0 %694
    %696 = vadd.xlane.f32.xlu0 %v693
    %v697 = vpop.xlane.xlu0 %696
    %v698 = vmul.f32 %v689, 0.03125
    %v699 = vmul.f32 %v691, 0.03125
    %v700 = vmul.f32 %v695, 0.03125
    %v701 = vmul.f32 %v697, 0.03125
    %v702 = vmul.f32 %v698, %v698
    %v703 = vmul.f32 %v699, %v699
    %v704 = vsub.f32 %v700, %v702
    %v705 = vsub.f32 %v701, %v703
    %v706 = vmax.f32 %v704, 0.0
    %v707 = vmax.f32 %v705, 0.0
    %v708 = vsub.f32 %v682, %v698
    %v709 = vsub.f32 %v685, %v699
    %v710 = vadd.f32 %v706, 1e-05
    %v711 = vadd.f32 %v707, 1e-05
    %v712 = vrsqrt.pop %v710
    %v713 = vrsqrt.pop %v711
    %v714 = vmul.f32 %v708, %v712
    %v715 = vmul.f32 %v709, %v713
    %716 = vst [vmem:[#allocation8] sm:$0xff] %v714
    %717 = vst [vmem:[#allocation8 + $0x8] sm:$0xff] %v715
    // Predicated region
    $region26: #{tpu_custom_call.1} parent=1 // pred_check
      _
    $region27: #{tpu_custom_call.1} parent=1 // pred_check_branch
      %719 = sbr.rel (0) target = $region29
    $region28: #{tpu_custom_call.1} parent=1 // pred_region
      %s721 = ssub.s32 256, 256
      %722 = vsyncadd [#allocation4], %s721
      %s723 = sshll.u32 [#allocation8], 4
      %s724 = int_to_ptr.vmem [resolvable:$true] %s723
      %729 = dma.vmem_to_hbm [thread:$0]  %s724, 256, %s3, [#allocation4], 128, 128, 8
    $region29: #{tpu_custom_call.1} parent=1 // pred_fallthru
      _
    // Predicated region
    $region30: #{tpu_custom_call.1} parent=1 // pred_check
      _
    $region31: #{tpu_custom_call.1} parent=1 // pred_check_branch
      %731 = sbr.rel (0) target = $region33
    $region32: #{tpu_custom_call.1} parent=1 // pred_region
      %732 = dma.done [#allocation4], 256
    $region33: #{tpu_custom_call.1} parent=1 // pred_fallthru
      _
    %733 = vsyncpa [#allocation3], 1
    %734 = vsyncpa [#allocation6], 1
    %735 = vsyncpa [#allocation4], 1

</llo_original>
